<compile_context>
chip_gen: v6e
topology: v6e:2x2x1
jax: 0.10.0
libtpu: 0.0.40
codegen_flags: <defaults>
</compile_context>

<pallas_src>
import functools

import jax
import jax.numpy as jnp
from jax.experimental import pallas as pl
from jax.experimental.pallas import tpu as pltpu

TEMPERATURE = 13.544


def _sims_kernel(x_ref, o_ref, sqk_ref, *, tq, scale2, half_scale2, hoist):
    """One (batch-block, query-tile) grid step.

    x_ref   : (BT, N, D)  all rows of this batch block (resident across q).
    o_ref   : (BT, TQ, N) output slab (head dim of size 1 squeezed away).
    sqk_ref : (BT, 1, N)  f32 scratch holding (1/T^2) * ||x_k||^2 for all keys.
    """
    q = pl.program_id(1)
    xk = x_ref[...]                                     # native dtype, for MXU

    def fill_sqk():
        xf = xk.astype(jnp.float32)
        sqk_ref[...] = (half_scale2 * jnp.sum(xf * xf, axis=-1))[:, None, :]

    if hoist:
        # Key norms are identical for every query tile of this batch block:
        # compute them once (the q axis is marked "arbitrary" in this mode).
        @pl.when(q == 0)
        def _():
            fill_sqk()
    else:
        fill_sqk()

    # Query tile = rows [q*tq, q*tq + tq) of the resident block (single input).
    start = pl.multiple_of(q * tq, 8 if tq % 8 == 0 else 1)
    xq = x_ref[:, pl.ds(start, tq), :]                  # (BT, TQ, D) native

    xqf = xq.astype(jnp.float32)
    hq = half_scale2 * jnp.sum(xqf * xqf, axis=-1, keepdims=True)   # (BT,TQ,1)

    # Fold temperature + the gram factor 2 into the tiny query tile so no
    # O(N^2) scaling multiply remains in the epilogue.
    yq = xq * jnp.asarray(scale2, dtype=xq.dtype)
    gram = jnp.einsum("bqd,bkd->bqk", yq, xk,
                      preferred_element_type=jnp.float32)           # (BT,TQ,N)

    u = jnp.maximum(hq + sqk_ref[...] - gram, 0.0)      # = dist^2 / T^2
    # logits = -dist/T = -sqrt(u); dist(i,i)==0 => row max is 0, no max-shift.
    e = jnp.exp(-jnp.sqrt(u))
    denom = jnp.sum(e, axis=-1, keepdims=True)          # (BT, TQ, 1)

    # EUP approximate reciprocal + one Newton refinement (tiny per-row slab).
    r = pl.reciprocal(denom, approx=True)
    r = r * (2.0 - denom * r)
    o_ref[...] = (e * r).astype(o_ref.dtype)


def _vmem_capacity_bytes() -> int:
    try:
        cap = getattr(pltpu.get_tpu_info(), "vmem_capacity_bytes", None)
        if cap:
            return int(cap)
    except Exception:
        pass
    return 64 * 1024 * 1024          # conservative (v7x-sized) default


def _pick_tq(n: int, cap: int) -> int:
    """Largest query-row tile <= cap that divides N and is a multiple of 8."""
    if n <= cap:
        return n
    for t in range(min(cap, n), 7, -1):
        if n % t == 0 and t % 8 == 0:
            return t
    return n


def _pick_bt(b: int, n: int, max_out_bytes: int = 2 << 20) -> int:
    """Batch several B per step when N is small (amortize per-step overhead),
    but keep >= 2 batch-axis grid steps when B >= 2 (v7x has 2 TensorCores)."""
    if n >= 256 or b == 1:
        return 1
    limit = max(1, b // 2)
    best = 1
    for bt in range(1, limit + 1):
        if b % bt == 0 and bt * n * n * 4 <= max_out_bytes:
            best = bt
    return best


def _vmem_estimate(bt, tq, n, d, in_itemsize, out_itemsize):
    kv = 2 * bt * n * d * in_itemsize          # double-buffered resident block
    out = 2 * bt * tq * n * out_itemsize       # double-buffered output slab
    epi = 3 * bt * tq * n * 4                  # gram/u, e, cast temporaries
    sqk = bt * 8 * max(n, 128) * 4             # key-norm scratch (padded)
    nrm = bt * n * d * 4                       # f32 temp for the norm reduce
    return kv + out + epi + sqk + nrm


def sims_forward(x: jax.Array, temperature: float = TEMPERATURE,
                 *, tq: int | None = None, bt: int | None = None,
                 out_dtype=None) -> jax.Array:
    """Pallas TPU implementation of Sims.forward.

    x: (B, N, D) float array.  Returns (B, 1, N, N) softmax-ed similarities.
    """
    B, N, D = x.shape
    out_dtype = x.dtype if out_dtype is None else jnp.dtype(out_dtype)

    cap = _vmem_capacity_bytes()
    if cap >= (128 << 20):           # v5e / v6e class: use most of 128 MiB
        budget, limit_cap, tq_cap = 96 << 20, 110 << 20, 1024
    else:                            # v7x class: 64 MiB, keep real headroom
        budget, limit_cap, tq_cap = 30 << 20, 46 << 20, 512

    if bt is None:
        bt = _pick_bt(B, N)
    if tq is None:
        tq = _pick_tq(N, tq_cap)
        # v7x has 2 TensorCores: if the batch axis cannot be split, split the
        # (parallel) query axis instead so both cores get work.
        if B // bt == 1 and N // tq == 1 and tq >= 256 and tq % 16 == 0:
            tq //= 2
    assert B % bt == 0 and N % tq == 0, (B, N, bt, tq)
    assert N // tq == 1 or tq % 8 == 0, (N, tq)

    in_sz = jnp.dtype(x.dtype).itemsize
    out_sz = jnp.dtype(out_dtype).itemsize
    while (_vmem_estimate(bt, tq, N, D, in_sz, out_sz) > budget
           and tq % 16 == 0 and tq > 8):
        tq //= 2
    est = _vmem_estimate(bt, tq, N, D, in_sz, out_sz)
    if est > budget:
        # The whole key block must stay resident in this design; beyond this a
        # key-axis (flash-style online-softmax) tiling would be required.
        raise ValueError(
            f"Sims kernel working set (~{est >> 20} MiB) exceeds the VMEM "
            f"budget ({budget >> 20} MiB) for shape {(B, N, D)}.")
    # vmem limit always >= the estimate (plus margin), capped per generation.
    vmem_limit = int(min(limit_cap, max(est + (8 << 20), 32 << 20)))

    n_b, n_q = B // bt, N // tq
    # Hoist key norms across the q axis only when the batch axis alone already
    # gives the megacore >= 2 parallel steps; otherwise keep q "parallel" and
    # recompute the cheap O(N*D) norm each step.
    hoist = (n_q > 1) and (n_b >= 2)
    dim_sem = ("parallel", "arbitrary" if hoist else "parallel")

    kernel = functools.partial(
        _sims_kernel, tq=tq,
        scale2=2.0 / (temperature * temperature),
        half_scale2=1.0 / (temperature * temperature),
        hoist=hoist)

    return pl.pallas_call(
        kernel,
        out_shape=jax.ShapeDtypeStruct((B, 1, N, N), out_dtype),
        grid_spec=pltpu.PrefetchScalarGridSpec(
            num_scalar_prefetch=0,
            grid=(n_b, n_q),
            in_specs=[
                # Single input: full (bt, N, D) batch block; block index is
                # constant along q so it is DMA'd once per batch block and the
                # query tile is sliced out of it in-kernel.
                pl.BlockSpec((bt, N, D), lambda b, q: (b, 0, 0)),
            ],
            # size-1 head dim squeezed out of the kernel ref
            out_specs=pl.BlockSpec((bt, None, tq, N), lambda b, q: (b, 0, q, 0)),
            scratch_shapes=[pltpu.VMEM((bt, 1, N), jnp.float32)],
        ),
        compiler_params=pltpu.CompilerParams(
            dimension_semantics=dim_sem,
            vmem_limit_bytes=vmem_limit,
        ),
    )(x)


def _reference(x: jnp.ndarray, temperature: float = TEMPERATURE) -> jnp.ndarray:
    # Pure-JAX reference mirroring torch.cdist + softmax + unsqueeze(1).
    diff = x[:, :, None, :] - x[:, None, :, :]
    dist = jnp.sqrt(jnp.maximum(jnp.sum(diff * diff, axis=-1), 0.0))
    return jax.nn.softmax(-dist / temperature, axis=-1)[:, None, :, :]


def _check(x, **kw):
    out = sims_forward(x, **kw)
    jax.block_until_ready(out)
    ref = _reference(x)
    assert out.shape == ref.shape, (out.shape, ref.shape)
    err = float(jnp.max(jnp.abs(out.astype(jnp.float32) - ref)))
    assert err < 2e-4, err
    return out


if __name__ == "__main__":
    key = jax.random.PRNGKey(0)
    k1, k2, k3, k4 = jax.random.split(key, 4)

    # Primary small shape: lane-dense output (N = 128), single query tile.
    _check(jax.random.normal(k1, (2, 128, 32), dtype=jnp.float32))
    # Multi-q-tile path with hoisted key norms (batch axis gives parallelism).
    _check(jax.random.normal(k2, (2, 256, 32), dtype=jnp.float32), tq=128)
    # B == 1: the query axis is split instead, so both v7x TCs get work.
    _check(jax.random.normal(k3, (1, 256, 32), dtype=jnp.float32))
    # Tiny shape matching the module-scale hint (batch=2, seq=8, hidden=32).
    _check(jax.random.normal(k4, (2, 8, 32), dtype=jnp.float32))

    print("KERNEL_OK")
</pallas_src>

<mosaic_0001>
module attributes {stable_mosaic.version = 11 : i64} {
  func.func @_sims_kernel(%arg0: i32, %arg1: i32, %arg2: memref<1x128x32xf32, #tpu.memory_space<vmem>>, %arg3: memref<1x1x128x128xf32, #tpu.memory_space<vmem>>, %arg4: memref<1x1x128xf32, #tpu.memory_space<vmem>>) attributes {dimension_semantics = [#tpu.dimension_semantics<parallel>, #tpu.dimension_semantics<parallel>], iteration_bounds = array<i64: 2, 1>, scalar_prefetch = 0 : i64, scratch_operands = 1 : i64, tpu.core_type = #tpu.core_type<tc>, window_params = [{transform_indices = @transform_0, window_bounds = array<i64: 1, 128, 32>}, {transform_indices = @transform_1, window_bounds = array<i64: 1, 1, 128, 128>}]} {
    %c0 = arith.constant 0 : index
    %c0_0 = arith.constant 0 : index
    %c0_1 = arith.constant 0 : index
    %0 = vector.load %arg2[%c0, %c0_0, %c0_1] : memref<1x128x32xf32, #tpu.memory_space<vmem>>, vector<1x128x32xf32>
    %1 = arith.mulf %0, %0 : vector<1x128x32xf32>
    %cst = arith.constant dense<0.000000e+00> : vector<1x128xf32>
    %2 = vector.multi_reduction <add>, %1, %cst [2] : vector<1x128x32xf32> to vector<1x128xf32>
    %cst_2 = arith.constant 0.00545137562 : f32
    %3 = vector.broadcast %cst_2 : f32 to vector<1x128xf32>
    %4 = arith.mulf %3, %2 : vector<1x128xf32>
    %5 = vector.shape_cast %4 : vector<1x128xf32> to vector<1x1x128xf32>
    %c0_3 = arith.constant 0 : index
    %c0_4 = arith.constant 0 : index
    %c0_5 = arith.constant 0 : index
    %6 = vector.load %arg4[%c0_3, %c0_4, %c0_5] : memref<1x1x128xf32, #tpu.memory_space<vmem>>, vector<1x1x128xf32>
    tpu.vector_store %arg4[%c0_3, %c0_4, %c0_5], %5 {strides = array<i32>} : memref<1x1x128xf32, #tpu.memory_space<vmem>>, vector<1x1x128xf32>,
    %c128_i32 = arith.constant 128 : i32
    %7 = arith.muli %arg1, %c128_i32 : i32
    %8 = tpu.assume_multiple %7, 8 : i32
    %c0_6 = arith.constant 0 : index
    %9 = arith.index_cast %8 : i32 to index
    %c0_7 = arith.constant 0 : index
    %10 = vector.load %arg2[%c0_6, %9, %c0_7] : memref<1x128x32xf32, #tpu.memory_space<vmem>>, vector<1x128x32xf32>
    %11 = arith.mulf %10, %10 : vector<1x128x32xf32>
    %cst_8 = arith.constant dense<0.000000e+00> : vector<1x128xf32>
    %12 = vector.multi_reduction <add>, %11, %cst_8 [2] : vector<1x128x32xf32> to vector<1x128xf32>
    %13 = vector.shape_cast %12 : vector<1x128xf32> to vector<1x128x1xf32>
    %cst_9 = arith.constant 0.00545137562 : f32
    %14 = vector.broadcast %cst_9 : f32 to vector<1x128x1xf32>
    %15 = arith.mulf %14, %13 : vector<1x128x1xf32>
    %cst_10 = arith.constant 0.0109027512 : f32
    %16 = vector.broadcast %cst_10 : f32 to vector<1x128x32xf32>
    %17 = arith.mulf %10, %16 : vector<1x128x32xf32>
    "tpu.trace_start"() <{level = 10 : i32, message = "bqd,bkd->bqk"}> : () -> ()
    %cst_11 = arith.constant dense<0.000000e+00> : vector<1x128x128xf32>
    %18 = tpu.matmul %17, %0, %cst_11 {dimension_numbers = #tpu.dot_dimension_numbers<[2], [2], [1], [1], [0, 0, 0, 1, 1, 1], [0], [0]>} : vector<1x128x32xf32>, vector<1x128x32xf32>, vector<1x128x128xf32> -> vector<1x128x128xf32>
    "tpu.trace_stop"() : () -> ()
    %c0_12 = arith.constant 0 : index
    %c0_13 = arith.constant 0 : index
    %c0_14 = arith.constant 0 : index
    %19 = vector.load %arg4[%c0_12, %c0_13, %c0_14] : memref<1x1x128xf32, #tpu.memory_space<vmem>>, vector<1x1x128xf32>
    %20 = vector.broadcast %15 : vector<1x128x1xf32> to vector<1x128x128xf32>
    %21 = vector.broadcast %19 : vector<1x1x128xf32> to vector<1x128x128xf32>
    %22 = arith.addf %20, %21 : vector<1x128x128xf32>
    %23 = arith.subf %22, %18 : vector<1x128x128xf32>
    %cst_15 = arith.constant 0.000000e+00 : f32
    %24 = vector.broadcast %cst_15 : f32 to vector<1x128x128xf32>
    %25 = arith.maximumf %23, %24 : vector<1x128x128xf32>
    %26 = math.sqrt %25 : vector<1x128x128xf32>
    %cst_16 = arith.constant 0.000000e+00 : f32
    %27 = vector.broadcast %cst_16 : f32 to vector<1x128x128xf32>
    %28 = arith.subf %27, %26 : vector<1x128x128xf32>
    %29 = math.exp %28 : vector<1x128x128xf32>
    %cst_17 = arith.constant dense<0.000000e+00> : vector<1x128xf32>
    %30 = vector.multi_reduction <add>, %29, %cst_17 [2] : vector<1x128x128xf32> to vector<1x128xf32>
    %31 = vector.shape_cast %30 : vector<1x128xf32> to vector<1x128x1xf32>
    %32 = tpu.reciprocal %31 {approx = true} : vector<1x128x1xf32> -> vector<1x128x1xf32>
    %33 = arith.mulf %31, %32 : vector<1x128x1xf32>
    %cst_18 = arith.constant 2.000000e+00 : f32
    %34 = vector.broadcast %cst_18 : f32 to vector<1x128x1xf32>
    %35 = arith.subf %34, %33 : vector<1x128x1xf32>
    %36 = arith.mulf %32, %35 : vector<1x128x1xf32>
    %37 = vector.broadcast %36 : vector<1x128x1xf32> to vector<1x128x128xf32>
    %38 = arith.mulf %29, %37 : vector<1x128x128xf32>
    %c0_19 = arith.constant 0 : index
    %c0_20 = arith.constant 0 : index
    %c0_21 = arith.constant 0 : index
    %c0_22 = arith.constant 0 : index
    %39 = vector.load %arg3[%c0_19, %c0_20, %c0_21, %c0_22] : memref<1x1x128x128xf32, #tpu.memory_space<vmem>>, vector<1x1x128x128xf32>
    %40 = vector.shape_cast %39 : vector<1x1x128x128xf32> to vector<1x128x128xf32>
    %41 = vector.shape_cast %38 : vector<1x128x128xf32> to vector<1x1x128x128xf32>
    tpu.vector_store %arg3[%c0_19, %c0_20, %c0_21, %c0_22], %41 {strides = array<i32>} : memref<1x1x128x128xf32, #tpu.memory_space<vmem>>, vector<1x1x128x128xf32>,
    return
  }
  func.func @transform_0(%arg0: i32, %arg1: i32) -> (i32, i32, i32) {
    %c0_i32 = arith.constant 0 : i32
    %c0_i32_0 = arith.constant 0 : i32
    %c0_i32_1 = arith.constant 0 : i32
    return %arg0, %c0_i32, %c0_i32_0 : i32, i32, i32
  }
  func.func @transform_1(%arg0: i32, %arg1: i32) -> (i32, i32, i32, i32) {
    %c0_i32 = arith.constant 0 : i32
    %c0_i32_0 = arith.constant 0 : i32
    %c0_i32_1 = arith.constant 0 : i32
    return %arg0, %c0_i32, %arg1, %c0_i32_0 : i32, i32, i32, i32
  }
}

</mosaic_0001>

<llo_original>
// kernel: tpu_custom_call.1
$region0: #{tpu_custom_call.1}
  #allocation0 [shape = 'u32[]', space=smem, size = 0x4, offset = 0x4, fixed_abs, tag = 'smem constant byte address 0x4 - core index']
  #allocation1 [shape = 'u32[144,128]{1,0:T(1,128)}', space=vmem, size = 0x12000, scoped, tag = 'internal scratch']
  #allocation2 [shape = 'f32[1,1,128]{2,1,0:T(1,128)}', space=vmem, size = 0x200, scoped, tag = 'scratch operand']
  %s0 = inlined_call_operand.vmem [shape: f32[2,128,32], index: 0, kind: input, shape index: {}]
  %s1 = inlined_call_operand.hbm [shape: f32[2,1,128,128], index: 1, kind: output, shape index: {}]
  %s2 = sld [smem:[#allocation0]]
  $region37: #{tpu_custom_call.1} parent=0
    _
  %s4 = ssub.s32 1, %s2
  %s5 = scalar_select 0, %s4, %s2
  $region1: #{tpu_custom_call.1} parent=0
    #allocation3 [shape = 'u8[131072]{0}', space=vmem, size = 0x20000, scoped, tag = 'output window, operand 0']
    #allocation4 [shape = 's32[2]{0}', space=sflag, size = 0x8, scoped, tag = 'scoped memory for tpu_custom_call.1']
    %6 = vsyncpa [#allocation4], 0
    %s7 = scalar_lea.sflag [#allocation4], 1
    %8 = vsyncpa %s7, 0
    loop: start=0, step=1, limit=4
    $region2: #{tpu_custom_call.1} parent=1 // loop_pre_header
      _
    $region3: #{tpu_custom_call.1} parent=1 // loop_header
      %s10 = sphi 0, %s14
      %p11 = scmp.ge.s32.totalorder %s10, 4
      %s17 = sphi 0, %s29
      %s18 = sphi 0, %s25
      %s19 = sphi 0, %s17
      %s20 = sphi 0, %s18
      %s21 = sphi 0, %s19
      %s22 = sphi 0, %s20
      %s32 = sphi 0, %s34
      %s35 = sphi 0, %s32
      %s36 = sphi 0, %s35
      %s52 = sphi 0, %s36
      %s60 = sphi 0, %s62
      %s63 = sphi 0, %s60
      %s64 = sphi 0, %s63
      %s80 = sphi 0, %s64
    $region4: #{tpu_custom_call.1} parent=1 // loop_header_branch
      %13 = sbr.rel (%p11) target = $region8
    $region5: #{tpu_custom_call.1} parent=1 // loop_body
      %s15 = ssub.s32 %s10, 1
      %s16 = ssub.s32 %s10, 2
      %s23 = sadd.s32 1, %s18
      %p24 = scmp.ge.s32.totalorder %s23, 1
      %s25 = scalar_select %p24, 0, %s23
      %s26 = sadd.s32 1, %s17
      %s27 = scalar_select %p24, %s26, %s17
      %p28 = scmp.ge.s32.totalorder %s27, 2
      %s29 = scalar_select %p28, 0, %s27
      %s30 = ssub.s32 %s17, %s29
      %p31 = scmp.eq.s32.totalorder %s30, 0
      %s33 = sadd.s32 %s32, 1
      %s34 = scalar_select %p31, %s32, %s33
      %p37 = pneg %p31
      %p38 = scmp.eq.s32.totalorder %s10, 1
      %p39 = por %p37, %p38
      %p40 = scmp.ne.s32.totalorder %s32, %s35
      %p41 = scmp.eq.s32.totalorder %s10, 0
      %p42 = por %p40, %p41
      %p43 = scmp.ne.s32.totalorder %s32, %s35
      %p44 = scmp.eq.s32.totalorder %s15, 1
      %p45 = por %p43, %p44
      %p46 = scmp.ne.s32.totalorder %s35, %s36
      %p47 = scmp.eq.s32.totalorder %s15, 0
      %p48 = por %p46, %p47
      %p49 = scmp.ne.s32.totalorder %s35, %s36
      %p50 = scmp.eq.s32.totalorder %s16, 1
      %p51 = por %p49, %p50
      %p53 = scmp.ne.s32.totalorder %s36, %s52
      %p54 = scmp.eq.s32.totalorder %s16, 0
      %p55 = por %p53, %p54
      %s56 = ssub.s32 %s17, %s29
      %s57 = ssub.s32 %s18, %s25
      %s58 = sor.u32 %s56, %s57
      %p59 = scmp.eq.s32.totalorder %s58, 0
      %s61 = sadd.s32 %s60, 1
      %s62 = scalar_select %p59, %s60, %s61
      %p65 = pneg %p59
      %p66 = scmp.eq.s32.totalorder %s10, 1
      %p67 = por %p65, %p66
      %p68 = scmp.ne.s32.totalorder %s60, %s63
      %p69 = scmp.eq.s32.totalorder %s10, 0
      %p70 = por %p68, %p69
      %p71 = scmp.ne.s32.totalorder %s60, %s63
      %p72 = scmp.eq.s32.totalorder %s15, 1
      %p73 = por %p71, %p72
      %p74 = scmp.ne.s32.totalorder %s63, %s64
      %p75 = scmp.eq.s32.totalorder %s15, 0
      %p76 = por %p74, %p75
      %p77 = scmp.ne.s32.totalorder %s63, %s64
      %p78 = scmp.eq.s32.totalorder %s16, 1
      %p79 = por %p77, %p78
      %p81 = scmp.ne.s32.totalorder %s64, %s80
      %p82 = scmp.eq.s32.totalorder %s16, 0
      %p83 = por %p81, %p82
      %p84 = scmp.le.s32.totalorder 1, %s10
      %p85 = scmp.lt.s32.totalorder %s10, 3
      %p86 = pnand %p84, %p85
      %p87 = pneg %p86
      // Predicated region
      $region9: #{tpu_custom_call.1} parent=5 // pred_check
        _
      $region10: #{tpu_custom_call.1} parent=5 // pred_check_branch
        %89 = sbr.rel (%p86) target = $region12
      $region11: #{tpu_custom_call.1} parent=5 // pred_region
        %s90 = ssub.s32 %s10, 1
      $region12: #{tpu_custom_call.1} parent=5 // pred_fallthru
        _
      %p91 = scmp.lt.s32.totalorder %s10, 2
      // Predicated region
      $region13: #{tpu_custom_call.1} parent=5 // pred_check
        %p92 = pneg %p91
      $region14: #{tpu_custom_call.1} parent=5 // pred_check_branch
        %94 = sbr.rel (%p92) target = $region16
      $region15: #{tpu_custom_call.1} parent=5 // pred_region
        // Predicated region
        $region17: #{tpu_custom_call.1} parent=15 // pred_check
          %p95 = pneg %p42
        $region18: #{tpu_custom_call.1} parent=15 // pred_check_branch
          %97 = sbr.rel (%p95) target = $region20
        $region19: #{tpu_custom_call.1} parent=15 // pred_region
          %p98 = scmp.lt.s32.totalorder %s17, 1
          %s99 = scalar_select %p98, %s17, 1
          %s100 = smul.addr %s99, 16
          %s101 = smul.addr %s100, 8
          %s102 = scalar_lea.vmem %s0, %s101
        $region20: #{tpu_custom_call.1} parent=15 // pred_fallthru
          _
      $region16: #{tpu_custom_call.1} parent=5 // pred_fallthru
        _
      %p103 = scmp.le.s32.totalorder 1, %s10
      %p104 = scmp.lt.s32.totalorder %s10, 3
      %p105 = pnand %p103, %p104
      %p106 = pneg %p105
      // Predicated region
      $region21: #{tpu_custom_call.1} parent=5 // pred_check
        _
      $region22: #{tpu_custom_call.1} parent=5 // pred_check_branch
        %108 = sbr.rel (%p105) target = $region24
      $region23: #{tpu_custom_call.1} parent=5 // pred_region
        %s109 = ssub.s32 %s10, 1
        %p110 = scmp.lt.s32.totalorder %s19, 1
        %s111 = scalar_select %p110, %s19, 1
        %s112 = smul.addr %s111, 16
        %s113 = smul.addr %s112, 8
        %s114 = scalar_lea.vmem %s0, %s113
        %p115 = pneg %p48
        %p116 = pneg %p45
        %p117 = pneg %p76
        %p118 = pneg %p73
        %s119 = sand.u32 %s63, 1
        %s120 = scalar_lea.sflag [#allocation4], %s119
        %s121 = sand.u32 %s63, 1
        %s122 = smul.addr %s121, 128
        %s123 = scalar_lea.vmem [#allocation3], %s122
        %p124 = scmp.lt.s32.totalorder %s19, 1
        %s125 = scalar_select %p124, %s19, 1
        %s126 = smul.addr %s125, 16
        %s127 = smul.addr %s126, 8
        %s128 = scalar_lea.vmem %s0, %s127
        %s129 = smul.u32 16, %s20
        %v130 = vld [vmem:[%s128] sm:$0xff]
        %v131 = vld [vmem:[%s128 + $0x8] sm:$0xff]
        %v132 = vld [vmem:[%s128 + $0x10] sm:$0xff]
        %v133 = vld [vmem:[%s128 + $0x18] sm:$0xff]
        %v134 = vld [vmem:[%s128 + $0x20] sm:$0xff]
        %v135 = vld [vmem:[%s128 + $0x28] sm:$0xff]
        %v136 = vld [vmem:[%s128 + $0x30] sm:$0xff]
        %v137 = vld [vmem:[%s128 + $0x38] sm:$0xff]
        %v138 = vld [vmem:[%s128 + $0x40] sm:$0xff]
        %v139 = vld [vmem:[%s128 + $0x48] sm:$0xff]
        %v140 = vld [vmem:[%s128 + $0x50] sm:$0xff]
        %v141 = vld [vmem:[%s128 + $0x58] sm:$0xff]
        %v142 = vld [vmem:[%s128 + $0x60] sm:$0xff]
        %v143 = vld [vmem:[%s128 + $0x68] sm:$0xff]
        %v144 = vld [vmem:[%s128 + $0x70] sm:$0xff]
        %v145 = vld [vmem:[%s128 + $0x78] sm:$0xff]
        %v146 = vmul.f32 %v130, %v130
        %v147 = vmul.f32 %v131, %v131
        %v148 = vmul.f32 %v132, %v132
        %v149 = vmul.f32 %v133, %v133
        %v150 = vmul.f32 %v134, %v134
        %v151 = vmul.f32 %v135, %v135
        %v152 = vmul.f32 %v136, %v136
        %v153 = vmul.f32 %v137, %v137
        %v154 = vmul.f32 %v138, %v138
        %v155 = vmul.f32 %v139, %v139
        %v156 = vmul.f32 %v140, %v140
        %v157 = vmul.f32 %v141, %v141
        %v158 = vmul.f32 %v142, %v142
        %v159 = vmul.f32 %v143, %v143
        %v160 = vmul.f32 %v144, %v144
        %v161 = vmul.f32 %v145, %v145
        %vm162 = vcmask 261120
        %v163 = vsel %vm162, %v146, 0.0
        %164 = vadd.xlane.f32.xlu0 %v163
        %v165 = vpop.xlane.xlu0 %164
        %v166 = vsel %vm162, %v147, 0.0
        %167 = vadd.xlane.f32.xlu0 %v166
        %v168 = vpop.xlane.xlu0 %167
        %v169 = vsel %vm162, %v148, 0.0
        %170 = vadd.xlane.f32.xlu0 %v169
        %v171 = vpop.xlane.xlu0 %170
        %v172 = vsel %vm162, %v149, 0.0
        %173 = vadd.xlane.f32.xlu0 %v172
        %v174 = vpop.xlane.xlu0 %173
        %v175 = vsel %vm162, %v150, 0.0
        %176 = vadd.xlane.f32.xlu0 %v175
        %v177 = vpop.xlane.xlu0 %176
        %v178 = vsel %vm162, %v151, 0.0
        %179 = vadd.xlane.f32.xlu0 %v178
        %v180 = vpop.xlane.xlu0 %179
        %v181 = vsel %vm162, %v152, 0.0
        %182 = vadd.xlane.f32.xlu0 %v181
        %v183 = vpop.xlane.xlu0 %182
        %v184 = vsel %vm162, %v153, 0.0
        %185 = vadd.xlane.f32.xlu0 %v184
        %v186 = vpop.xlane.xlu0 %185
        %v187 = vsel %vm162, %v154, 0.0
        %188 = vadd.xlane.f32.xlu0 %v187
        %v189 = vpop.xlane.xlu0 %188
        %v190 = vsel %vm162, %v155, 0.0
        %191 = vadd.xlane.f32.xlu0 %v190
        %v192 = vpop.xlane.xlu0 %191
        %v193 = vsel %vm162, %v156, 0.0
        %194 = vadd.xlane.f32.xlu0 %v193
        %v195 = vpop.xlane.xlu0 %194
        %v196 = vsel %vm162, %v157, 0.0
        %197 = vadd.xlane.f32.xlu0 %v196
        %v198 = vpop.xlane.xlu0 %197
        %v199 = vsel %vm162, %v158, 0.0
        %200 = vadd.xlane.f32.xlu0 %v199
        %v201 = vpop.xlane.xlu0 %200
        %v202 = vsel %vm162, %v159, 0.0
        %203 = vadd.xlane.f32.xlu0 %v202
        %v204 = vpop.xlane.xlu0 %203
        %v205 = vsel %vm162, %v160, 0.0
        %206 = vadd.xlane.f32.xlu0 %v205
        %v207 = vpop.xlane.xlu0 %206
        %v208 = vsel %vm162, %v161, 0.0
        %209 = vadd.xlane.f32.xlu0 %v208
        %v210 = vpop.xlane.xlu0 %209
        %v211 = vmul.f32 %v165, 0.0054513756
        %v212 = vmul.f32 %v168, 0.0054513756
        %v213 = vmul.f32 %v171, 0.0054513756
        %v214 = vmul.f32 %v174, 0.0054513756
        %v215 = vmul.f32 %v177, 0.0054513756
        %v216 = vmul.f32 %v180, 0.0054513756
        %v217 = vmul.f32 %v183, 0.0054513756
        %v218 = vmul.f32 %v186, 0.0054513756
        %v219 = vmul.f32 %v189, 0.0054513756
        %v220 = vmul.f32 %v192, 0.0054513756
        %v221 = vmul.f32 %v195, 0.0054513756
        %v222 = vmul.f32 %v198, 0.0054513756
        %v223 = vmul.f32 %v201, 0.0054513756
        %v224 = vmul.f32 %v204, 0.0054513756
        %v225 = vmul.f32 %v207, 0.0054513756
        %v226 = vmul.f32 %v210, 0.0054513756
        %v243 = vlaneseq
        %v244 = vand.u32 %v243, 127
        %v245 = vlaneseq
        %v246 = vshrl.u32 %v245, 7
        %v247 = vsub.s32 %v244, %v246
        %v248 = vrot.slane %v211, %v247
        %v249 = vadd.s32 %v244, 4294967288
        %v250 = vlaneseq
        %v251 = vshrl.u32 %v250, 7
        %v252 = vsub.s32 %v249, %v251
        %v253 = vrot.slane %v212, %v252
        %vm254 = vcmask 130112
        %v255 = vsel %vm254, %v253, %v248
        %v256 = vadd.s32 %v244, 4294967280
        %v257 = vlaneseq
        %v258 = vshrl.u32 %v257, 7
        %v259 = vsub.s32 %v256, %v258
        %v260 = vrot.slane %v213, %v259
        %vm261 = vcmask 195712
        %v262 = vsel %vm261, %v260, %v255
        %v263 = vadd.s32 %v244, 4294967272
        %v264 = vlaneseq
        %v265 = vshrl.u32 %v264, 7
        %v266 = vsub.s32 %v263, %v265
        %v267 = vrot.slane %v214, %v266
        %vm268 = vcmask 261312
        %v269 = vsel %vm268, %v267, %v262
        %v270 = vadd.s32 %v244, 4294967264
        %v271 = vlaneseq
        %v272 = vshrl.u32 %v271, 7
        %v273 = vsub.s32 %v270, %v272
        %v274 = vrot.slane %v215, %v273
        %vm275 = vcmask 326912
        %v276 = vsel %vm275, %v274, %v269
        %v277 = vadd.s32 %v244, 4294967256
        %v278 = vlaneseq
        %v279 = vshrl.u32 %v278, 7
        %v280 = vsub.s32 %v277, %v279
        %v281 = vrot.slane %v216, %v280
        %vm282 = vcmask 392512
        %v283 = vsel %vm282, %v281, %v276
        %v284 = vadd.s32 %v244, 4294967248
        %v285 = vlaneseq
        %v286 = vshrl.u32 %v285, 7
        %v287 = vsub.s32 %v284, %v286
        %v288 = vrot.slane %v217, %v287
        %vm289 = vcmask 458112
        %v290 = vsel %vm289, %v288, %v283
        %v291 = vadd.s32 %v244, 4294967240
        %v292 = vlaneseq
        %v293 = vshrl.u32 %v292, 7
        %v294 = vsub.s32 %v291, %v293
        %v295 = vrot.slane %v218, %v294
        %vm296 = vcmask 523712
        %v297 = vsel %vm296, %v295, %v290
        %v298 = vadd.s32 %v244, 4294967232
        %v299 = vlaneseq
        %v300 = vshrl.u32 %v299, 7
        %v301 = vsub.s32 %v298, %v300
        %v302 = vrot.slane %v219, %v301
        %vm303 = vcmask 589312
        %v304 = vsel %vm303, %v302, %v297
        %v305 = vadd.s32 %v244, 4294967224
        %v306 = vlaneseq
        %v307 = vshrl.u32 %v306, 7
        %v308 = vsub.s32 %v305, %v307
        %v309 = vrot.slane %v220, %v308
        %vm310 = vcmask 654912
        %v311 = vsel %vm310, %v309, %v304
        %v312 = vadd.s32 %v244, 4294967216
        %v313 = vlaneseq
        %v314 = vshrl.u32 %v313, 7
        %v315 = vsub.s32 %v312, %v314
        %v316 = vrot.slane %v221, %v315
        %vm317 = vcmask 720512
        %v318 = vsel %vm317, %v316, %v311
        %v319 = vadd.s32 %v244, 4294967208
        %v320 = vlaneseq
        %v321 = vshrl.u32 %v320, 7
        %v322 = vsub.s32 %v319, %v321
        %v323 = vrot.slane %v222, %v322
        %vm324 = vcmask 786112
        %v325 = vsel %vm324, %v323, %v318
        %v326 = vadd.s32 %v244, 4294967200
        %v327 = vlaneseq
        %v328 = vshrl.u32 %v327, 7
        %v329 = vsub.s32 %v326, %v328
        %v330 = vrot.slane %v223, %v329
        %vm331 = vcmask 851712
        %v332 = vsel %vm331, %v330, %v325
        %v333 = vadd.s32 %v244, 4294967192
        %v334 = vlaneseq
        %v335 = vshrl.u32 %v334, 7
        %v336 = vsub.s32 %v333, %v335
        %v337 = vrot.slane %v224, %v336
        %vm338 = vcmask 917312
        %v339 = vsel %vm338, %v337, %v332
        %v340 = vadd.s32 %v244, 4294967184
        %v341 = vlaneseq
        %v342 = vshrl.u32 %v341, 7
        %v343 = vsub.s32 %v340, %v342
        %v344 = vrot.slane %v225, %v343
        %vm345 = vcmask 982912
        %v346 = vsel %vm345, %v344, %v339
        %v347 = vadd.s32 %v244, 4294967176
        %v348 = vlaneseq
        %v349 = vshrl.u32 %v348, 7
        %v350 = vsub.s32 %v347, %v349
        %v351 = vrot.slane %v226, %v350
        %vm352 = vcmask 1048512
        %v353 = vsel %vm352, %v351, %v346
        %355 = vst [vmem:[#allocation2] sm:$0x1] %v353
        %s356 = smul.u32 %s20, 128
        %s357 = scalar_lea.vmem %s128, %s356
        %v358 = vld [vmem:[%s357] sm:$0xff]
        %v359 = vld [vmem:[%s357 + $0x8] sm:$0xff]
        %v360 = vld [vmem:[%s357 + $0x10] sm:$0xff]
        %v361 = vld [vmem:[%s357 + $0x18] sm:$0xff]
        %v362 = vld [vmem:[%s357 + $0x20] sm:$0xff]
        %v363 = vld [vmem:[%s357 + $0x28] sm:$0xff]
        %v364 = vld [vmem:[%s357 + $0x30] sm:$0xff]
        %v365 = vld [vmem:[%s357 + $0x38] sm:$0xff]
        %v366 = vld [vmem:[%s357 + $0x40] sm:$0xff]
        %v367 = vld [vmem:[%s357 + $0x48] sm:$0xff]
        %v368 = vld [vmem:[%s357 + $0x50] sm:$0xff]
        %v369 = vld [vmem:[%s357 + $0x58] sm:$0xff]
        %v370 = vld [vmem:[%s357 + $0x60] sm:$0xff]
        %v371 = vld [vmem:[%s357 + $0x68] sm:$0xff]
        %v372 = vld [vmem:[%s357 + $0x70] sm:$0xff]
        %v373 = vld [vmem:[%s357 + $0x78] sm:$0xff]
        %v374 = vmul.f32 %v358, %v358
        %v375 = vmul.f32 %v359, %v359
        %v376 = vmul.f32 %v360, %v360
        %v377 = vmul.f32 %v361, %v361
        %v378 = vmul.f32 %v362, %v362
        %v379 = vmul.f32 %v363, %v363
        %v380 = vmul.f32 %v364, %v364
        %v381 = vmul.f32 %v365, %v365
        %v382 = vmul.f32 %v366, %v366
        %v383 = vmul.f32 %v367, %v367
        %v384 = vmul.f32 %v368, %v368
        %v385 = vmul.f32 %v369, %v369
        %v386 = vmul.f32 %v370, %v370
        %v387 = vmul.f32 %v371, %v371
        %v388 = vmul.f32 %v372, %v372
        %v389 = vmul.f32 %v373, %v373
        %v390 = vsel %vm162, %v374, 0.0
        %391 = vadd.xlane.f32.xlu0 %v390
        %v392 = vpop.xlane.xlu0 %391
        %v393 = vsel %vm162, %v375, 0.0
        %394 = vadd.xlane.f32.xlu0 %v393
        %v395 = vpop.xlane.xlu0 %394
        %v396 = vsel %vm162, %v376, 0.0
        %397 = vadd.xlane.f32.xlu0 %v396
        %v398 = vpop.xlane.xlu0 %397
        %v399 = vsel %vm162, %v377, 0.0
        %400 = vadd.xlane.f32.xlu0 %v399
        %v401 = vpop.xlane.xlu0 %400
        %v402 = vsel %vm162, %v378, 0.0
        %403 = vadd.xlane.f32.xlu0 %v402
        %v404 = vpop.xlane.xlu0 %403
        %v405 = vsel %vm162, %v379, 0.0
        %406 = vadd.xlane.f32.xlu0 %v405
        %v407 = vpop.xlane.xlu0 %406
        %v408 = vsel %vm162, %v380, 0.0
        %409 = vadd.xlane.f32.xlu0 %v408
        %v410 = vpop.xlane.xlu0 %409
        %v411 = vsel %vm162, %v381, 0.0
        %412 = vadd.xlane.f32.xlu0 %v411
        %v413 = vpop.xlane.xlu0 %412
        %v414 = vsel %vm162, %v382, 0.0
        %415 = vadd.xlane.f32.xlu0 %v414
        %v416 = vpop.xlane.xlu0 %415
        %v417 = vsel %vm162, %v383, 0.0
        %418 = vadd.xlane.f32.xlu0 %v417
        %v419 = vpop.xlane.xlu0 %418
        %v420 = vsel %vm162, %v384, 0.0
        %421 = vadd.xlane.f32.xlu0 %v420
        %v422 = vpop.xlane.xlu0 %421
        %v423 = vsel %vm162, %v385, 0.0
        %424 = vadd.xlane.f32.xlu0 %v423
        %v425 = vpop.xlane.xlu0 %424
        %v426 = vsel %vm162, %v386, 0.0
        %427 = vadd.xlane.f32.xlu0 %v426
        %v428 = vpop.xlane.xlu0 %427
        %v429 = vsel %vm162, %v387, 0.0
        %430 = vadd.xlane.f32.xlu0 %v429
        %v431 = vpop.xlane.xlu0 %430
        %v432 = vsel %vm162, %v388, 0.0
        %433 = vadd.xlane.f32.xlu0 %v432
        %v434 = vpop.xlane.xlu0 %433
        %v435 = vsel %vm162, %v389, 0.0
        %436 = vadd.xlane.f32.xlu0 %v435
        %v437 = vpop.xlane.xlu0 %436
        %v438 = vmul.f32 %v392, 0.0054513756
        %v439 = vmul.f32 %v395, 0.0054513756
        %v440 = vmul.f32 %v398, 0.0054513756
        %v441 = vmul.f32 %v401, 0.0054513756
        %v442 = vmul.f32 %v404, 0.0054513756
        %v443 = vmul.f32 %v407, 0.0054513756
        %v444 = vmul.f32 %v410, 0.0054513756
        %v445 = vmul.f32 %v413, 0.0054513756
        %v446 = vmul.f32 %v416, 0.0054513756
        %v447 = vmul.f32 %v419, 0.0054513756
        %v448 = vmul.f32 %v422, 0.0054513756
        %v449 = vmul.f32 %v425, 0.0054513756
        %v450 = vmul.f32 %v428, 0.0054513756
        %v451 = vmul.f32 %v431, 0.0054513756
        %v452 = vmul.f32 %v434, 0.0054513756
        %v453 = vmul.f32 %v437, 0.0054513756
        %v454 = vmul.f32 %v358, 0.010902751
        %v455 = vmul.f32 %v359, 0.010902751
        %v456 = vmul.f32 %v360, 0.010902751
        %v457 = vmul.f32 %v361, 0.010902751
        %v458 = vmul.f32 %v362, 0.010902751
        %v459 = vmul.f32 %v363, 0.010902751
        %v460 = vmul.f32 %v364, 0.010902751
        %v461 = vmul.f32 %v365, 0.010902751
        %v462 = vmul.f32 %v366, 0.010902751
        %v463 = vmul.f32 %v367, 0.010902751
        %v464 = vmul.f32 %v368, 0.010902751
        %v465 = vmul.f32 %v369, 0.010902751
        %v466 = vmul.f32 %v370, 0.010902751
        %v467 = vmul.f32 %v371, 0.010902751
        %v468 = vmul.f32 %v372, 0.010902751
        %v469 = vmul.f32 %v373, 0.010902751
        %v471 = vsel %vm162, %v454, 0
        %v474 = vsel %vm162, %v455, 0
        %v477 = vsel %vm162, %v456, 0
        %v480 = vsel %vm162, %v457, 0
        %v483 = vsel %vm162, %v458, 0
        %v486 = vsel %vm162, %v459, 0
        %v489 = vsel %vm162, %v460, 0
        %v492 = vsel %vm162, %v461, 0
        %v495 = vsel %vm162, %v462, 0
        %v498 = vsel %vm162, %v463, 0
        %v501 = vsel %vm162, %v464, 0
        %v504 = vsel %vm162, %v465, 0
        %v507 = vsel %vm162, %v466, 0
        %v510 = vsel %vm162, %v467, 0
        %v513 = vsel %vm162, %v468, 0
        %v516 = vsel %vm162, %v469, 0
        %v519 = vsel %vm162, %v130, 0
        %v522 = vsel %vm162, %v131, 0
        %v525 = vsel %vm162, %v132, 0
        %v528 = vsel %vm162, %v133, 0
        %v531 = vsel %vm162, %v134, 0
        %v534 = vsel %vm162, %v135, 0
        %v537 = vsel %vm162, %v136, 0
        %v540 = vsel %vm162, %v137, 0
        %v543 = vsel %vm162, %v138, 0
        %v546 = vsel %vm162, %v139, 0
        %v549 = vsel %vm162, %v140, 0
        %v552 = vsel %vm162, %v141, 0
        %v555 = vsel %vm162, %v142, 0
        %v558 = vsel %vm162, %v143, 0
        %v561 = vsel %vm162, %v144, 0
        %v564 = vsel %vm162, %v145, 0
        %566 = vmatprep.subr.mxu0 0.0
        %567 = vmatpush1.xpose.msra.mxu0 %v564
        %568 = vmatprep.subr.mxu0 0.0
        %569 = vmatpush1.xpose.msra.mxu0 %v561
        %570 = vmatprep.subr.mxu0 0.0
        %571 = vmatpush1.xpose.msra.mxu0 %v558
        %572 = vmatprep.subr.mxu0 0.0
        %573 = vmatpush1.xpose.msra.mxu0 %v555
        %574 = vmatprep.subr.mxu0 0.0
        %575 = vmatpush1.xpose.msra.mxu0 %v552
        %576 = vmatprep.subr.mxu0 0.0
        %577 = vmatpush1.xpose.msra.mxu0 %v549
        %578 = vmatprep.subr.mxu0 0.0
        %579 = vmatpush1.xpose.msra.mxu0 %v546
        %580 = vmatprep.subr.mxu0 0.0
        %581 = vmatpush1.xpose.msra.mxu0 %v543
        %582 = vmatprep.subr.mxu0 0.0
        %583 = vmatpush1.xpose.msra.mxu0 %v540
        %584 = vmatprep.subr.mxu0 0.0
        %585 = vmatpush1.xpose.msra.mxu0 %v537
        %586 = vmatprep.subr.mxu0 0.0
        %587 = vmatpush1.xpose.msra.mxu0 %v534
        %588 = vmatprep.subr.mxu0 0.0
        %589 = vmatpush1.xpose.msra.mxu0 %v531
        %590 = vmatprep.subr.mxu0 0.0
        %591 = vmatpush1.xpose.msra.mxu0 %v528
        %592 = vmatprep.subr.mxu0 0.0
        %593 = vmatpush1.xpose.msra.mxu0 %v525
        %594 = vmatprep.subr.mxu0 0.0
        %595 = vmatpush1.xpose.msra.mxu0 %v522
        %596 = vmatprep.subr.mxu0 0.0
        %597 = vmatpush1.xpose.msra.mxu0 %v519
        %598 = vmatprep.subr.mxu0 0.0
        %599 = vmatpush2.xpose.msra.mxu0 0.0
        %600 = vmatprep.subr.mxu0 0.0
        %601 = vmatpush2.xpose.msra.mxu0 0.0
        %602 = vmatprep.subr.mxu0 0.0
        %603 = vmatpush2.xpose.msra.mxu0 0.0
        %604 = vmatprep.subr.mxu0 0.0
        %605 = vmatpush2.xpose.msra.mxu0 0.0
        %606 = vmatprep.subr.mxu0 0.0
        %607 = vmatpush2.xpose.msra.mxu0 0.0
        %608 = vmatprep.subr.mxu0 0.0
        %609 = vmatpush2.xpose.msra.mxu0 0.0
        %610 = vmatprep.subr.mxu0 0.0
        %611 = vmatpush2.xpose.msra.mxu0 0.0
        %612 = vmatprep.subr.mxu0 0.0
        %613 = vmatpush2.xpose.msra.mxu0 0.0
        %614 = vmatprep.subr.mxu0 0.0
        %615 = vmatpush2.xpose.msra.mxu0 0.0
        %616 = vmatprep.subr.mxu0 0.0
        %617 = vmatpush2.xpose.msra.mxu0 0.0
        %618 = vmatprep.subr.mxu0 0.0
        %619 = vmatpush2.xpose.msra.mxu0 0.0
        %620 = vmatprep.subr.mxu0 0.0
        %621 = vmatpush2.xpose.msra.mxu0 0.0
        %622 = vmatprep.subr.mxu0 0.0
        %623 = vmatpush2.xpose.msra.mxu0 0.0
        %624 = vmatprep.subr.mxu0 0.0
        %625 = vmatpush2.xpose.msra.mxu0 0.0
        %626 = vmatprep.subr.mxu0 0.0
        %627 = vmatpush2.xpose.msra.mxu0 0.0
        %628 = vmatprep.subr.mxu0 0.0
        %629 = vmatpush2.xpose.msra.mxu0 0.0
        %630 = vmatprep.mubr.f32.mxu0 0.0
        %631 = vmatmul.mubr.f32.gmra.mxu0 %v471
        %v632 = vpop.f32.mrf.mxu0
        %v633 = vadd.f32 0.0, %v632
        %v634 = vpop.f32.mrf.mxu0
        %635 = vmatprep.mubr.f32.mxu0 0.0
        %636 = vmatmul.mubr.f32.gmra.mxu0 %v474
        %v637 = vpop.f32.mrf.mxu0
        %v638 = vadd.f32 0.0, %v637
        %v639 = vpop.f32.mrf.mxu0
        %640 = vmatprep.mubr.f32.mxu0 0.0
        %641 = vmatmul.mubr.f32.gmra.mxu0 %v477
        %v642 = vpop.f32.mrf.mxu0
        %v643 = vadd.f32 0.0, %v642
        %v644 = vpop.f32.mrf.mxu0
        %645 = vmatprep.mubr.f32.mxu0 0.0
        %646 = vmatmul.mubr.f32.gmra.mxu0 %v480
        %v647 = vpop.f32.mrf.mxu0
        %v648 = vadd.f32 0.0, %v647
        %v649 = vpop.f32.mrf.mxu0
        %650 = vmatprep.mubr.f32.mxu0 0.0
        %651 = vmatmul.mubr.f32.gmra.mxu0 %v483
        %v652 = vpop.f32.mrf.mxu0
        %v653 = vadd.f32 0.0, %v652
        %v654 = vpop.f32.mrf.mxu0
        %655 = vmatprep.mubr.f32.mxu0 0.0
        %656 = vmatmul.mubr.f32.gmra.mxu0 %v486
        %v657 = vpop.f32.mrf.mxu0
        %v658 = vadd.f32 0.0, %v657
        %v659 = vpop.f32.mrf.mxu0
        %660 = vmatprep.mubr.f32.mxu0 0.0
        %661 = vmatmul.mubr.f32.gmra.mxu0 %v489
        %v662 = vpop.f32.mrf.mxu0
        %v663 = vadd.f32 0.0, %v662
        %v664 = vpop.f32.mrf.mxu0
        %665 = vmatprep.mubr.f32.mxu0 0.0
        %666 = vmatmul.mubr.f32.gmra.mxu0 %v492
        %v667 = vpop.f32.mrf.mxu0
        %v668 = vadd.f32 0.0, %v667
        %v669 = vpop.f32.mrf.mxu0
        %670 = vmatprep.mubr.f32.mxu0 0.0
        %671 = vmatmul.mubr.f32.gmra.mxu0 %v495
        %v672 = vpop.f32.mrf.mxu0
        %v673 = vadd.f32 0.0, %v672
        %v674 = vpop.f32.mrf.mxu0
        %675 = vmatprep.mubr.f32.mxu0 0.0
        %676 = vmatmul.mubr.f32.gmra.mxu0 %v498
        %v677 = vpop.f32.mrf.mxu0
        %v678 = vadd.f32 0.0, %v677
        %v679 = vpop.f32.mrf.mxu0
        %680 = vmatprep.mubr.f32.mxu0 0.0
        %681 = vmatmul.mubr.f32.gmra.mxu0 %v501
        %v682 = vpop.f32.mrf.mxu0
        %v683 = vadd.f32 0.0, %v682
        %v684 = vpop.f32.mrf.mxu0
        %685 = vmatprep.mubr.f32.mxu0 0.0
        %686 = vmatmul.mubr.f32.gmra.mxu0 %v504
        %v687 = vpop.f32.mrf.mxu0
        %v688 = vadd.f32 0.0, %v687
        %v689 = vpop.f32.mrf.mxu0
        %690 = vmatprep.mubr.f32.mxu0 0.0
        %691 = vmatmul.mubr.f32.gmra.mxu0 %v507
        %v692 = vpop.f32.mrf.mxu0
        %v693 = vadd.f32 0.0, %v692
        %v694 = vpop.f32.mrf.mxu0
        %695 = vmatprep.mubr.f32.mxu0 0.0
        %696 = vmatmul.mubr.f32.gmra.mxu0 %v510
        %v697 = vpop.f32.mrf.mxu0
        %v698 = vadd.f32 0.0, %v697
        %v699 = vpop.f32.mrf.mxu0
        %700 = vmatprep.mubr.f32.mxu0 0.0
        %701 = vmatmul.mubr.f32.gmra.mxu0 %v513
        %v702 = vpop.f32.mrf.mxu0
        %v703 = vadd.f32 0.0, %v702
        %v704 = vpop.f32.mrf.mxu0
        %705 = vmatprep.mubr.f32.mxu0 0.0
        %706 = vmatmul.mubr.f32.gmra.mxu0 %v516
        %v707 = vpop.f32.mrf.mxu0
        %v708 = vadd.f32 0.0, %v707
        %v709 = vpop.f32.mrf.mxu0
        %710 = vdwg.mxu0
        %v711 = vld [vmem:[#allocation2] sm:$0x1]
        %v713 = vlaneseq
        %v714 = vshrl.u32 %v713, 7
        %v715 = vsub.s32 0, %v714
        %v716 = vrot.slane %v711, %v715
        %v718 = vadd.f32 %v438, %v716
        %v719 = vadd.f32 %v439, %v716
        %v720 = vadd.f32 %v440, %v716
        %v721 = vadd.f32 %v441, %v716
        %v722 = vadd.f32 %v442, %v716
        %v723 = vadd.f32 %v443, %v716
        %v724 = vadd.f32 %v444, %v716
        %v725 = vadd.f32 %v445, %v716
        %v726 = vadd.f32 %v446, %v716
        %v727 = vadd.f32 %v447, %v716
        %v728 = vadd.f32 %v448, %v716
        %v729 = vadd.f32 %v449, %v716
        %v730 = vadd.f32 %v450, %v716
        %v731 = vadd.f32 %v451, %v716
        %v732 = vadd.f32 %v452, %v716
        %v733 = vadd.f32 %v453, %v716
        %v734 = vsub.f32 %v718, %v633
        %v735 = vsub.f32 %v719, %v638
        %v736 = vsub.f32 %v720, %v643
        %v737 = vsub.f32 %v721, %v648
        %v738 = vsub.f32 %v722, %v653
        %v739 = vsub.f32 %v723, %v658
        %v740 = vsub.f32 %v724, %v663
        %v741 = vsub.f32 %v725, %v668
        %v742 = vsub.f32 %v726, %v673
        %v743 = vsub.f32 %v727, %v678
        %v744 = vsub.f32 %v728, %v683
        %v745 = vsub.f32 %v729, %v688
        %v746 = vsub.f32 %v730, %v693
        %v747 = vsub.f32 %v731, %v698
        %v748 = vsub.f32 %v732, %v703
        %v749 = vsub.f32 %v733, %v708
        %v750 = vmax.f32 %v734, 0.0
        %v751 = vmax.f32 %v735, 0.0
        %v752 = vmax.f32 %v736, 0.0
        %v753 = vmax.f32 %v737, 0.0
        %v754 = vmax.f32 %v738, 0.0
        %v755 = vmax.f32 %v739, 0.0
        %v756 = vmax.f32 %v740, 0.0
        %v757 = vmax.f32 %v741, 0.0
        %v758 = vmax.f32 %v742, 0.0
        %v759 = vmax.f32 %v743, 0.0
        %v760 = vmax.f32 %v744, 0.0
        %v761 = vmax.f32 %v745, 0.0
        %v762 = vmax.f32 %v746, 0.0
        %v763 = vmax.f32 %v747, 0.0
        %v764 = vmax.f32 %v748, 0.0
        %v765 = vmax.f32 %v749, 0.0
        %v766 = vrsqrt.pop %v750
        %v767 = vmul.f32 %v750, %v766
        %vm768 = vcmp.eq.f32.partialorder %v750, inf
        %v769 = vsel %vm768, %v750, %v767
        %vm770 = vcmp.eq.f32.partialorder %v750, 0.0
        %v771 = vand.u32 %v750, 2147483648
        %v772 = vsel %vm770, %v771, %v769
        %v773 = vrsqrt.pop %v751
        %v774 = vmul.f32 %v751, %v773
        %vm775 = vcmp.eq.f32.partialorder %v751, inf
        %v776 = vsel %vm775, %v751, %v774
        %vm777 = vcmp.eq.f32.partialorder %v751, 0.0
        %v778 = vand.u32 %v751, 2147483648
        %v779 = vsel %vm777, %v778, %v776
        %v780 = vrsqrt.pop %v752
        %v781 = vmul.f32 %v752, %v780
        %vm782 = vcmp.eq.f32.partialorder %v752, inf
        %v783 = vsel %vm782, %v752, %v781
        %vm784 = vcmp.eq.f32.partialorder %v752, 0.0
        %v785 = vand.u32 %v752, 2147483648
        %v786 = vsel %vm784, %v785, %v783
        %v787 = vrsqrt.pop %v753
        %v788 = vmul.f32 %v753, %v787
        %vm789 = vcmp.eq.f32.partialorder %v753, inf
        %v790 = vsel %vm789, %v753, %v788
        %vm791 = vcmp.eq.f32.partialorder %v753, 0.0
        %v792 = vand.u32 %v753, 2147483648
        %v793 = vsel %vm791, %v792, %v790
        %v794 = vrsqrt.pop %v754
        %v795 = vmul.f32 %v754, %v794
        %vm796 = vcmp.eq.f32.partialorder %v754, inf
        %v797 = vsel %vm796, %v754, %v795
        %vm798 = vcmp.eq.f32.partialorder %v754, 0.0
        %v799 = vand.u32 %v754, 2147483648
        %v800 = vsel %vm798, %v799, %v797
        %v801 = vrsqrt.pop %v755
        %v802 = vmul.f32 %v755, %v801
        %vm803 = vcmp.eq.f32.partialorder %v755, inf
        %v804 = vsel %vm803, %v755, %v802
        %vm805 = vcmp.eq.f32.partialorder %v755, 0.0
        %v806 = vand.u32 %v755, 2147483648
        %v807 = vsel %vm805, %v806, %v804
        %v808 = vrsqrt.pop %v756
        %v809 = vmul.f32 %v756, %v808
        %vm810 = vcmp.eq.f32.partialorder %v756, inf
        %v811 = vsel %vm810, %v756, %v809
        %vm812 = vcmp.eq.f32.partialorder %v756, 0.0
        %v813 = vand.u32 %v756, 2147483648
        %v814 = vsel %vm812, %v813, %v811
        %v815 = vrsqrt.pop %v757
        %v816 = vmul.f32 %v757, %v815
        %vm817 = vcmp.eq.f32.partialorder %v757, inf
        %v818 = vsel %vm817, %v757, %v816
        %vm819 = vcmp.eq.f32.partialorder %v757, 0.0
        %v820 = vand.u32 %v757, 2147483648
        %v821 = vsel %vm819, %v820, %v818
        %v822 = vrsqrt.pop %v758
        %v823 = vmul.f32 %v758, %v822
        %vm824 = vcmp.eq.f32.partialorder %v758, inf
        %v825 = vsel %vm824, %v758, %v823
        %vm826 = vcmp.eq.f32.partialorder %v758, 0.0
        %v827 = vand.u32 %v758, 2147483648
        %v828 = vsel %vm826, %v827, %v825
        %v829 = vrsqrt.pop %v759
        %v830 = vmul.f32 %v759, %v829
        %vm831 = vcmp.eq.f32.partialorder %v759, inf
        %v832 = vsel %vm831, %v759, %v830
        %vm833 = vcmp.eq.f32.partialorder %v759, 0.0
        %v834 = vand.u32 %v759, 2147483648
        %v835 = vsel %vm833, %v834, %v832
        %v836 = vrsqrt.pop %v760
        %v837 = vmul.f32 %v760, %v836
        %vm838 = vcmp.eq.f32.partialorder %v760, inf
        %v839 = vsel %vm838, %v760, %v837
        %vm840 = vcmp.eq.f32.partialorder %v760, 0.0
        %v841 = vand.u32 %v760, 2147483648
        %v842 = vsel %vm840, %v841, %v839
        %v843 = vrsqrt.pop %v761
        %v844 = vmul.f32 %v761, %v843
        %vm845 = vcmp.eq.f32.partialorder %v761, inf
        %v846 = vsel %vm845, %v761, %v844
        %vm847 = vcmp.eq.f32.partialorder %v761, 0.0
        %v848 = vand.u32 %v761, 2147483648
        %v849 = vsel %vm847, %v848, %v846
        %v850 = vrsqrt.pop %v762
        %v851 = vmul.f32 %v762, %v850
        %vm852 = vcmp.eq.f32.partialorder %v762, inf
        %v853 = vsel %vm852, %v762, %v851
        %vm854 = vcmp.eq.f32.partialorder %v762, 0.0
        %v855 = vand.u32 %v762, 2147483648
        %v856 = vsel %vm854, %v855, %v853
        %v857 = vrsqrt.pop %v763
        %v858 = vmul.f32 %v763, %v857
        %vm859 = vcmp.eq.f32.partialorder %v763, inf
        %v860 = vsel %vm859, %v763, %v858
        %vm861 = vcmp.eq.f32.partialorder %v763, 0.0
        %v862 = vand.u32 %v763, 2147483648
        %v863 = vsel %vm861, %v862, %v860
        %v864 = vrsqrt.pop %v764
        %v865 = vmul.f32 %v764, %v864
        %vm866 = vcmp.eq.f32.partialorder %v764, inf
        %v867 = vsel %vm866, %v764, %v865
        %vm868 = vcmp.eq.f32.partialorder %v764, 0.0
        %v869 = vand.u32 %v764, 2147483648
        %v870 = vsel %vm868, %v869, %v867
        %v871 = vrsqrt.pop %v765
        %v872 = vmul.f32 %v765, %v871
        %vm873 = vcmp.eq.f32.partialorder %v765, inf
        %v874 = vsel %vm873, %v765, %v872
        %vm875 = vcmp.eq.f32.partialorder %v765, 0.0
        %v876 = vand.u32 %v765, 2147483648
        %v877 = vsel %vm875, %v876, %v874
        %v878 = vsub.f32 0.0, %v772
        %v879 = vsub.f32 0.0, %v779
        %v880 = vsub.f32 0.0, %v786
        %v881 = vsub.f32 0.0, %v793
        %v882 = vsub.f32 0.0, %v800
        %v883 = vsub.f32 0.0, %v807
        %v884 = vsub.f32 0.0, %v814
        %v885 = vsub.f32 0.0, %v821
        %v886 = vsub.f32 0.0, %v828
        %v887 = vsub.f32 0.0, %v835
        %v888 = vsub.f32 0.0, %v842
        %v889 = vsub.f32 0.0, %v849
        %v890 = vsub.f32 0.0, %v856
        %v891 = vsub.f32 0.0, %v863
        %v892 = vsub.f32 0.0, %v870
        %v893 = vsub.f32 0.0, %v877
        %v894 = vmul.f32 %v878, 1.442695
        %v895 = vpow.pop %v894
        %v896 = vmul.f32 %v879, 1.442695
        %v897 = vpow.pop %v896
        %v898 = vmul.f32 %v880, 1.442695
        %v899 = vpow.pop %v898
        %v900 = vmul.f32 %v881, 1.442695
        %v901 = vpow.pop %v900
        %v902 = vmul.f32 %v882, 1.442695
        %v903 = vpow.pop %v902
        %v904 = vmul.f32 %v883, 1.442695
        %v905 = vpow.pop %v904
        %v906 = vmul.f32 %v884, 1.442695
        %v907 = vpow.pop %v906
        %v908 = vmul.f32 %v885, 1.442695
        %v909 = vpow.pop %v908
        %v910 = vmul.f32 %v886, 1.442695
        %v911 = vpow.pop %v910
        %v912 = vmul.f32 %v887, 1.442695
        %v913 = vpow.pop %v912
        %v914 = vmul.f32 %v888, 1.442695
        %v915 = vpow.pop %v914
        %v916 = vmul.f32 %v889, 1.442695
        %v917 = vpow.pop %v916
        %v918 = vmul.f32 %v890, 1.442695
        %v919 = vpow.pop %v918
        %v920 = vmul.f32 %v891, 1.442695
        %v921 = vpow.pop %v920
        %v922 = vmul.f32 %v892, 1.442695
        %v923 = vpow.pop %v922
        %v924 = vmul.f32 %v893, 1.442695
        %v925 = vpow.pop %v924
        %926 = vadd.xlane.f32.xlu0 %v895
        %v927 = vpop.xlane.xlu0 %926
        %928 = vadd.xlane.f32.xlu0 %v897
        %v929 = vpop.xlane.xlu0 %928
        %930 = vadd.xlane.f32.xlu0 %v899
        %v931 = vpop.xlane.xlu0 %930
        %932 = vadd.xlane.f32.xlu0 %v901
        %v933 = vpop.xlane.xlu0 %932
        %934 = vadd.xlane.f32.xlu0 %v903
        %v935 = vpop.xlane.xlu0 %934
        %936 = vadd.xlane.f32.xlu0 %v905
        %v937 = vpop.xlane.xlu0 %936
        %938 = vadd.xlane.f32.xlu0 %v907
        %v939 = vpop.xlane.xlu0 %938
        %940 = vadd.xlane.f32.xlu0 %v909
        %v941 = vpop.xlane.xlu0 %940
        %942 = vadd.xlane.f32.xlu0 %v911
        %v943 = vpop.xlane.xlu0 %942
        %944 = vadd.xlane.f32.xlu0 %v913
        %v945 = vpop.xlane.xlu0 %944
        %946 = vadd.xlane.f32.xlu0 %v915
        %v947 = vpop.xlane.xlu0 %946
        %948 = vadd.xlane.f32.xlu0 %v917
        %v949 = vpop.xlane.xlu0 %948
        %950 = vadd.xlane.f32.xlu0 %v919
        %v951 = vpop.xlane.xlu0 %950
        %952 = vadd.xlane.f32.xlu0 %v921
        %v953 = vpop.xlane.xlu0 %952
        %954 = vadd.xlane.f32.xlu0 %v923
        %v955 = vpop.xlane.xlu0 %954
        %956 = vadd.xlane.f32.xlu0 %v925
        %v957 = vpop.xlane.xlu0 %956
        %v958 = vrcp.pop %v927
        %v959 = vrcp.pop %v929
        %v960 = vrcp.pop %v931
        %v961 = vrcp.pop %v933
        %v962 = vrcp.pop %v935
        %v963 = vrcp.pop %v937
        %v964 = vrcp.pop %v939
        %v965 = vrcp.pop %v941
        %v966 = vrcp.pop %v943
        %v967 = vrcp.pop %v945
        %v968 = vrcp.pop %v947
        %v969 = vrcp.pop %v949
        %v970 = vrcp.pop %v951
        %v971 = vrcp.pop %v953
        %v972 = vrcp.pop %v955
        %v973 = vrcp.pop %v957
        %v974 = vmul.f32 %v927, %v958
        %v975 = vmul.f32 %v929, %v959
        %v976 = vmul.f32 %v931, %v960
        %v977 = vmul.f32 %v933, %v961
        %v978 = vmul.f32 %v935, %v962
        %v979 = vmul.f32 %v937, %v963
        %v980 = vmul.f32 %v939, %v964
        %v981 = vmul.f32 %v941, %v965
        %v982 = vmul.f32 %v943, %v966
        %v983 = vmul.f32 %v945, %v967
        %v984 = vmul.f32 %v947, %v968
        %v985 = vmul.f32 %v949, %v969
        %v986 = vmul.f32 %v951, %v970
        %v987 = vmul.f32 %v953, %v971
        %v988 = vmul.f32 %v955, %v972
        %v989 = vmul.f32 %v957, %v973
        %v990 = vsub.f32 2.0, %v974
        %v991 = vsub.f32 2.0, %v975
        %v992 = vsub.f32 2.0, %v976
        %v993 = vsub.f32 2.0, %v977
        %v994 = vsub.f32 2.0, %v978
        %v995 = vsub.f32 2.0, %v979
        %v996 = vsub.f32 2.0, %v980
        %v997 = vsub.f32 2.0, %v981
        %v998 = vsub.f32 2.0, %v982
        %v999 = vsub.f32 2.0, %v983
        %v1000 = vsub.f32 2.0, %v984
        %v1001 = vsub.f32 2.0, %v985
        %v1002 = vsub.f32 2.0, %v986
        %v1003 = vsub.f32 2.0, %v987
        %v1004 = vsub.f32 2.0, %v988
        %v1005 = vsub.f32 2.0, %v989
        %v1006 = vmul.f32 %v958, %v990
        %v1007 = vmul.f32 %v959, %v991
        %v1008 = vmul.f32 %v960, %v992
        %v1009 = vmul.f32 %v961, %v993
        %v1010 = vmul.f32 %v962, %v994
        %v1011 = vmul.f32 %v963, %v995
        %v1012 = vmul.f32 %v964, %v996
        %v1013 = vmul.f32 %v965, %v997
        %v1014 = vmul.f32 %v966, %v998
        %v1015 = vmul.f32 %v967, %v999
        %v1016 = vmul.f32 %v968, %v1000
        %v1017 = vmul.f32 %v969, %v1001
        %v1018 = vmul.f32 %v970, %v1002
        %v1019 = vmul.f32 %v971, %v1003
        %v1020 = vmul.f32 %v972, %v1004
        %v1021 = vmul.f32 %v973, %v1005
        %v1022 = vmul.f32 %v895, %v1006
        %v1023 = vmul.f32 %v897, %v1007
        %v1024 = vmul.f32 %v899, %v1008
        %v1025 = vmul.f32 %v901, %v1009
        %v1026 = vmul.f32 %v903, %v1010
        %v1027 = vmul.f32 %v905, %v1011
        %v1028 = vmul.f32 %v907, %v1012
        %v1029 = vmul.f32 %v909, %v1013
        %v1030 = vmul.f32 %v911, %v1014
        %v1031 = vmul.f32 %v913, %v1015
        %v1032 = vmul.f32 %v915, %v1016
        %v1033 = vmul.f32 %v917, %v1017
        %v1034 = vmul.f32 %v919, %v1018
        %v1035 = vmul.f32 %v921, %v1019
        %v1036 = vmul.f32 %v923, %v1020
        %v1037 = vmul.f32 %v925, %v1021
        %1038 = vst [vmem:[%s123] sm:$0xff] %v1022
        %1039 = vst [vmem:[%s123 + $0x8] sm:$0xff] %v1023
        %1040 = vst [vmem:[%s123 + $0x10] sm:$0xff] %v1024
        %1041 = vst [vmem:[%s123 + $0x18] sm:$0xff] %v1025
        %1042 = vst [vmem:[%s123 + $0x20] sm:$0xff] %v1026
        %1043 = vst [vmem:[%s123 + $0x28] sm:$0xff] %v1027
        %1044 = vst [vmem:[%s123 + $0x30] sm:$0xff] %v1028
        %1045 = vst [vmem:[%s123 + $0x38] sm:$0xff] %v1029
        %1046 = vst [vmem:[%s123 + $0x40] sm:$0xff] %v1030
        %1047 = vst [vmem:[%s123 + $0x48] sm:$0xff] %v1031
        %1048 = vst [vmem:[%s123 + $0x50] sm:$0xff] %v1032
        %1049 = vst [vmem:[%s123 + $0x58] sm:$0xff] %v1033
        %1050 = vst [vmem:[%s123 + $0x60] sm:$0xff] %v1034
        %1051 = vst [vmem:[%s123 + $0x68] sm:$0xff] %v1035
        %1052 = vst [vmem:[%s123 + $0x70] sm:$0xff] %v1036
        %1053 = vst [vmem:[%s123 + $0x78] sm:$0xff] %v1037
        %s1054 = sand.u32 %s63, 1
        %s1055 = scalar_lea.sflag [#allocation4], %s1054
        %s1056 = sand.u32 %s63, 1
        %s1057 = smul.addr %s1056, 128
        %s1058 = scalar_lea.vmem [#allocation3], %s1057
        // Predicated region
        $region25: #{tpu_custom_call.1} parent=23 // pred_check
          %p1059 = pneg %p73
        $region26: #{tpu_custom_call.1} parent=23 // pred_check_branch
          %1061 = sbr.rel (%p1059) target = $region28
        $region27: #{tpu_custom_call.1} parent=23 // pred_region
          %s1062 = smul.u32 16, %s20
          %s1064 = ssub.s32 2048, 2048
          %1065 = vsyncadd %s1055, %s1064
          %s1066 = smul.addr %s19, 16
          %s1067 = sadd.s32 %s1062, %s1066
          %s1068 = smul.addr %s1067, 128
          %s1069 = scalar_lea.hbm %s1, %s1068
          %s1070 = sshll.u32 %s1058, 4
          %s1071 = int_to_ptr.vmem [resolvable:$true] %s1070
          %1076 = dma.vmem_to_hbm [thread:$0]  %s1071, 2048, %s1069, %s1055, 128, 128, 8
        $region28: #{tpu_custom_call.1} parent=23 // pred_fallthru
          _
      $region24: #{tpu_custom_call.1} parent=5 // pred_fallthru
        _
      %p1077 = scmp.le.s32.totalorder 2, %s10
      // Predicated region
      $region29: #{tpu_custom_call.1} parent=5 // pred_check
        %p1078 = pneg %p1077
      $region30: #{tpu_custom_call.1} parent=5 // pred_check_branch
        %1080 = sbr.rel (%p1078) target = $region32
      $region31: #{tpu_custom_call.1} parent=5 // pred_region
        %s1081 = ssub.s32 %s10, 2
        // Predicated region
        $region33: #{tpu_custom_call.1} parent=31 // pred_check
          %p1082 = pneg %p79
        $region34: #{tpu_custom_call.1} parent=31 // pred_check_branch
          %1084 = sbr.rel (%p1082) target = $region36
        $region35: #{tpu_custom_call.1} parent=31 // pred_region
          %s1085 = sand.u32 %s64, 1
          %s1086 = scalar_lea.sflag [#allocation4], %s1085
          %s1087 = sand.u32 %s64, 1
          %s1088 = smul.addr %s1087, 128
          %s1089 = scalar_lea.vmem [#allocation3], %s1088
          %1090 = dma.done %s1086, 2048
        $region36: #{tpu_custom_call.1} parent=31 // pred_fallthru
          _
      $region32: #{tpu_custom_call.1} parent=5 // pred_fallthru
        _
    $region6: #{tpu_custom_call.1} parent=1 // loop_footer
      %s14 = sadd.s32 1, %s10
    $region7: #{tpu_custom_call.1} parent=1 // loop_footer_branch
      %9 = sbr.rel target = $region3
    $region8: #{tpu_custom_call.1} parent=1 // loop_exit
      _
    %1091 = vsyncpa [#allocation4], 1
    %s1092 = scalar_lea.sflag [#allocation4], 1
    %1093 = vsyncpa %s1092, 1

</llo_original>
